<compile_context>
chip_gen: v6e
topology: v6e:2x2x1
jax: 0.10.0
libtpu: 0.0.40
codegen_flags: <defaults>
</compile_context>

<pallas_src>
import jax
import jax.numpy as jnp
import numpy as np
from jax.experimental import pallas as pl
from jax.experimental.pallas import tpu as pltpu

LANES = 128
MAX_ROWS_PER_TILE = 4096      # 4096 x 128 x 4B = 2 MiB per f32 block
MIN_ROWS_TO_SPLIT = 256       # below this: single block; above: >= 2 grid steps


def fusion_kernel(inv_ref, x1_ref, x2_ref, o_ref):
    # inv_ref: (1,) f32 reciprocal of `factor` in SMEM.
    # x1/x2/o: (row_tile, 128) lane-dense tiles in VMEM.
    inv = inv_ref[0]
    s = x1_ref[...].astype(jnp.float32) + x2_ref[...].astype(jnp.float32)
    o_ref[...] = (s * inv).astype(o_ref.dtype)


def _sublane_pack(dtype):
    # f32 -> 8, bf16 -> 16, int8/fp8 -> 32 (sub-32-bit dtypes pack along sublanes).
    return max(8, 32 // jnp.dtype(dtype).itemsize)


def fusion(x1, x2, factor):
    """(x1 + x2) / factor with a scalar `factor` (matches Fusion.forward)."""
    assert x1.shape == x2.shape, "x1 and x2 must have the same shape"
    orig_shape = x1.shape
    dtype = jnp.result_type(x1.dtype, x2.dtype)
    n = x1.size

    # TODO(synk): a non-scalar (broadcasting) `factor` tensor would need a third
    # VMEM operand; this module is used with a scalar divisor.
    # Keep the reciprocal in f32 in SMEM (32-bit scalar path) for all dtypes.
    inv = 1.0 / jnp.asarray(factor, jnp.float32).reshape(-1)[:1]

    # ---- lane-dense flatten: (...) -> (rows, 128) --------------------------
    x1f = jnp.ravel(x1).astype(dtype)
    x2f = jnp.ravel(x2).astype(dtype)
    rem = (-n) % LANES
    if rem:
        # TODO(synk): only taken when numel % 128 != 0; one minimal tail pad.
        x1f = jnp.pad(x1f, (0, rem))
        x2f = jnp.pad(x2f, (0, rem))
    rows = (n + rem) // LANES
    x1m = x1f.reshape(rows, LANES)
    x2m = x2f.reshape(rows, LANES)

    # ---- tiling -------------------------------------------------------------
    pack = _sublane_pack(dtype)
    if rows < MIN_ROWS_TO_SPLIT:
        # Tiny input: one block (block_shape == full array is always legal).
        row_tile = rows
    else:
        # At least 2 grid steps (keeps both v7x TensorCores busy), capped at
        # 2 MiB/stream blocks, rounded up to the dtype's sublane packing.
        half = pl.cdiv(rows, 2)
        row_tile = min(MAX_ROWS_PER_TILE, ((half + pack - 1) // pack) * pack)
    grid = (pl.cdiv(rows, row_tile),)   # Pallas masks the partial last block

    out = pl.pallas_call(
        fusion_kernel,
        out_shape=jax.ShapeDtypeStruct((rows, LANES), dtype),
        grid=grid,
        in_specs=[
            pl.BlockSpec(memory_space=pltpu.MemorySpace.SMEM),   # 1/factor (f32)
            pl.BlockSpec((row_tile, LANES), lambda i: (i, 0)),   # x1
            pl.BlockSpec((row_tile, LANES), lambda i: (i, 0)),   # x2
        ],
        out_specs=pl.BlockSpec((row_tile, LANES), lambda i: (i, 0)),
        compiler_params=pltpu.CompilerParams(
            dimension_semantics=("parallel",),      # shard tiles across 2 TCs on v7x
            vmem_limit_bytes=32 * 1024 * 1024,      # 3 streams x 2 bufs x 2 MiB + slack
        ),
    )(inv, x1m, x2m)

    out = out.reshape(-1)
    if rem:
        out = out[:n]
    return out.reshape(orig_shape)


def reference(x1, x2, factor):
    """Pure-JAX reference matching the PyTorch forward pass."""
    return (x1 + x2) / factor


if __name__ == "__main__":
    key = jax.random.PRNGKey(0)
    k1, k2 = jax.random.split(key, 2)

    # Small shapes consistent with the module: batch=2, channels=4, spatial=16.
    x1 = jax.random.normal(k1, (2, 4, 16, 16), jnp.float32)
    x2 = jax.random.normal(k2, (2, 4, 16, 16), jnp.float32)
    factor = jnp.float32(2.5)

    out = jax.block_until_ready(fusion(x1, x2, factor))
    ref = jax.block_until_ready(reference(x1, x2, factor))
    # rtol 1e-5 accommodates the 1-ulp difference of reciprocal-multiply vs divide.
    np.testing.assert_allclose(np.asarray(out), np.asarray(ref), atol=1e-6, rtol=1e-5)
    print("KERNEL_OK")
</pallas_src>

<mosaic_0001>
module attributes {stable_mosaic.version = 11 : i64} {
  func.func @fusion_kernel(%arg0: i32, %arg1: memref<1xf32, #tpu.memory_space<smem>>, %arg2: memref<16x128xf32, #tpu.memory_space<vmem>>, %arg3: memref<16x128xf32, #tpu.memory_space<vmem>>, %arg4: memref<16x128xf32, #tpu.memory_space<vmem>>) attributes {dimension_semantics = [#tpu.dimension_semantics<parallel>], iteration_bounds = array<i64: 1>, scalar_prefetch = 0 : i64, scratch_operands = 0 : i64, tpu.core_type = #tpu.core_type<tc>, window_params = [{transform_indices = @transform_0, window_bounds = array<i64: 1>}, {transform_indices = @transform_1, window_bounds = array<i64: 16, 128>}, {transform_indices = @transform_2, window_bounds = array<i64: 16, 128>}, {transform_indices = @transform_3, window_bounds = array<i64: 16, 128>}]} {
    %c0 = arith.constant 0 : index
    %0 = memref.load %arg1[%c0] : memref<1xf32, #tpu.memory_space<smem>>
    %c0_0 = arith.constant 0 : index
    %c0_1 = arith.constant 0 : index
    %1 = vector.load %arg2[%c0_0, %c0_1] : memref<16x128xf32, #tpu.memory_space<vmem>>, vector<16x128xf32>
    %c0_2 = arith.constant 0 : index
    %c0_3 = arith.constant 0 : index
    %2 = vector.load %arg3[%c0_2, %c0_3] : memref<16x128xf32, #tpu.memory_space<vmem>>, vector<16x128xf32>
    %3 = arith.addf %1, %2 : vector<16x128xf32>
    %4 = vector.broadcast %0 : f32 to vector<16x128xf32>
    %5 = arith.mulf %3, %4 : vector<16x128xf32>
    %c0_4 = arith.constant 0 : index
    %c0_5 = arith.constant 0 : index
    %6 = vector.load %arg4[%c0_4, %c0_5] : memref<16x128xf32, #tpu.memory_space<vmem>>, vector<16x128xf32>
    tpu.vector_store %arg4[%c0_4, %c0_5], %5 {strides = array<i32>} : memref<16x128xf32, #tpu.memory_space<vmem>>, vector<16x128xf32>,
    return
  }
  func.func @transform_0(%arg0: i32) -> i32 {
    %c0_i32 = arith.constant 0 : i32
    %c0_i32_0 = arith.constant 0 : i32
    return %c0_i32 : i32
  }
  func.func @transform_1(%arg0: i32) -> (i32, i32) {
    %c0_i32 = arith.constant 0 : i32
    %c0_i32_0 = arith.constant 0 : i32
    return %arg0, %c0_i32 : i32, i32
  }
  func.func @transform_2(%arg0: i32) -> (i32, i32) {
    %c0_i32 = arith.constant 0 : i32
    %c0_i32_0 = arith.constant 0 : i32
    return %arg0, %c0_i32 : i32, i32
  }
  func.func @transform_3(%arg0: i32) -> (i32, i32) {
    %c0_i32 = arith.constant 0 : i32
    %c0_i32_0 = arith.constant 0 : i32
    return %arg0, %c0_i32 : i32, i32
  }
}

</mosaic_0001>

<llo_original>
// kernel: tpu_custom_call.1
$region0: #{tpu_custom_call.1}
  #allocation0 [shape = 'u32[]', space=smem, size = 0x4, offset = 0x4, fixed_abs, tag = 'smem constant byte address 0x4 - core index']
  #allocation1 [shape = 'u32[144,128]{1,0:T(1,128)}', space=vmem, size = 0x12000, scoped, tag = 'internal scratch']
  #allocation2 [shape = 'f32[1]{0:T(128)S(6)}', space=smem, size = 0x200, scoped, tag = 'scoped memory for tpu_custom_call.1']
  %s0 = inlined_call_operand.<no memory space> [shape: f32[1], index: 0, kind: input, shape index: {}]
  %s1 = inlined_call_operand.hbm [shape: f32[16,128], index: 1, kind: input, shape index: {}]
  %s2 = inlined_call_operand.hbm [shape: f32[16,128], index: 2, kind: input, shape index: {}]
  %s3 = inlined_call_operand.hbm [shape: f32[16,128], index: 3, kind: output, shape index: {}]
  %s4 = sld [smem:[#allocation0]]
  $region30: #{tpu_custom_call.1} parent=0
    _
  %s6 = ssub.s32 1, %s4
  %s7 = scalar_select 0, %s6, %s4
  %8 = sst [smem:[#allocation2]] %s0
  $region1: #{tpu_custom_call.1} parent=0
    #allocation3 [shape = 'u8[8192]{0}', space=vmem, size = 0x2000, scoped, tag = 'input window, operand 1, single buffered']
    #allocation4 [shape = 's32[1]{0}', space=sflag, size = 0x4, scoped, tag = 'scoped memory for tpu_custom_call.1']
    #allocation5 [shape = 's32[1]{0}', space=sflag, size = 0x4, scoped, tag = 'scoped memory for tpu_custom_call.1']
    #allocation6 [shape = 'u8[8192]{0}', space=vmem, size = 0x2000, scoped, tag = 'input window, operand 2, single buffered']
    #allocation7 [shape = 's32[1]{0}', space=sflag, size = 0x4, scoped, tag = 'scoped memory for tpu_custom_call.1']
    #allocation8 [shape = 'u8[8192]{0}', space=vmem, size = 0x2000, scoped, tag = 'output window, operand 0, single buffered']
    %9 = vsyncpa [#allocation4], 0
    %10 = vsyncpa [#allocation7], 0
    %11 = vsyncpa [#allocation5], 0
    // Predicated region
    $region2: #{tpu_custom_call.1} parent=1 // pred_check
      _
    $region3: #{tpu_custom_call.1} parent=1 // pred_check_branch
      %13 = sbr.rel (0) target = $region5
    $region4: #{tpu_custom_call.1} parent=1 // pred_region
      _
    $region5: #{tpu_custom_call.1} parent=1 // pred_fallthru
      _
    // Predicated region
    $region6: #{tpu_custom_call.1} parent=1 // pred_check
      _
    $region7: #{tpu_custom_call.1} parent=1 // pred_check_branch
      %15 = sbr.rel (0) target = $region9
    $region8: #{tpu_custom_call.1} parent=1 // pred_region
      %s17 = ssub.s32 256, 256
      %18 = vsyncadd [#allocation4], %s17
      %s19 = sshll.u32 [#allocation3], 4
      %s20 = int_to_ptr.vmem [resolvable:$true] %s19
      %25 = dma.hbm_to_vmem [thread:$0]  %s1, 256, %s20, [#allocation4], 128, 128, 8
    $region9: #{tpu_custom_call.1} parent=1 // pred_fallthru
      _
    // Predicated region
    $region10: #{tpu_custom_call.1} parent=1 // pred_check
      _
    $region11: #{tpu_custom_call.1} parent=1 // pred_check_branch
      %27 = sbr.rel (0) target = $region13
    $region12: #{tpu_custom_call.1} parent=1 // pred_region
      %s29 = ssub.s32 256, 256
      %30 = vsyncadd [#allocation7], %s29
      %s31 = sshll.u32 [#allocation6], 4
      %s32 = int_to_ptr.vmem [resolvable:$true] %s31
      %37 = dma.hbm_to_vmem [thread:$0]  %s2, 256, %s32, [#allocation7], 128, 128, 8
    $region13: #{tpu_custom_call.1} parent=1 // pred_fallthru
      _
    // Predicated region
    $region14: #{tpu_custom_call.1} parent=1 // pred_check
      _
    $region15: #{tpu_custom_call.1} parent=1 // pred_check_branch
      %39 = sbr.rel (0) target = $region17
    $region16: #{tpu_custom_call.1} parent=1 // pred_region
      %40 = dma.done [#allocation4], 256
    $region17: #{tpu_custom_call.1} parent=1 // pred_fallthru
      _
    // Predicated region
    $region18: #{tpu_custom_call.1} parent=1 // pred_check
      _
    $region19: #{tpu_custom_call.1} parent=1 // pred_check_branch
      %42 = sbr.rel (0) target = $region21
    $region20: #{tpu_custom_call.1} parent=1 // pred_region
      %43 = dma.done [#allocation7], 256
    $region21: #{tpu_custom_call.1} parent=1 // pred_fallthru
      _
    %s44 = sld [smem:[#allocation2]]
    %v45 = vld [vmem:[#allocation3] sm:$0xff]
    %v46 = vld [vmem:[#allocation3 + $0x8] sm:$0xff]
    %v47 = vld [vmem:[#allocation6] sm:$0xff]
    %v48 = vld [vmem:[#allocation6 + $0x8] sm:$0xff]
    %v49 = vadd.f32 %v45, %v47
    %v50 = vadd.f32 %v46, %v48
    %v51 = vstv %s44
    %v52 = vmul.f32 %v49, %v51
    %v53 = vmul.f32 %v50, %v51
    %54 = vst [vmem:[#allocation8] sm:$0xff] %v52
    %55 = vst [vmem:[#allocation8 + $0x8] sm:$0xff] %v53
    // Predicated region
    $region22: #{tpu_custom_call.1} parent=1 // pred_check
      _
    $region23: #{tpu_custom_call.1} parent=1 // pred_check_branch
      %57 = sbr.rel (0) target = $region25
    $region24: #{tpu_custom_call.1} parent=1 // pred_region
      %s59 = ssub.s32 256, 256
      %60 = vsyncadd [#allocation5], %s59
      %s61 = sshll.u32 [#allocation8], 4
      %s62 = int_to_ptr.vmem [resolvable:$true] %s61
      %67 = dma.vmem_to_hbm [thread:$0]  %s62, 256, %s3, [#allocation5], 128, 128, 8
    $region25: #{tpu_custom_call.1} parent=1 // pred_fallthru
      _
    // Predicated region
    $region26: #{tpu_custom_call.1} parent=1 // pred_check
      _
    $region27: #{tpu_custom_call.1} parent=1 // pred_check_branch
      %69 = sbr.rel (0) target = $region29
    $region28: #{tpu_custom_call.1} parent=1 // pred_region
      %70 = dma.done [#allocation5], 256
    $region29: #{tpu_custom_call.1} parent=1 // pred_fallthru
      _
    %71 = vsyncpa [#allocation4], 1
    %72 = vsyncpa [#allocation7], 1
    %73 = vsyncpa [#allocation5], 1

</llo_original>
